<compile_context>
chip_gen: v5e
topology: v5e:2x2
jax: 0.10.0
libtpu: 0.0.40
codegen_flags: <defaults>
</compile_context>

<pallas_src>
import math

import jax
import jax.numpy as jnp
from jax.experimental import pallas as pl
from jax.experimental.pallas import tpu as pltpu

_MIB = 1024 * 1024


def _cdiv(a, b):
    return -(-a // b)


def _round_up(x, m):
    return _cdiv(x, m) * m


# ---------------------------------------------------------------------------
# Kernels
# ---------------------------------------------------------------------------

def _ffn_kernel_acc(x_ref, w1_ref, b1_ref, w2_ref, b2_ref, o_ref, acc_ref):
    """Streamed-d_ff FFN using an f32 VMEM accumulator (non-f32 outputs)."""
    k = pl.program_id(1)

    @pl.when(k == 0)
    def _():
        acc_ref[...] = jnp.zeros_like(acc_ref)

    # fc1 chunk + bias + ReLU.  MXU accumulates in f32 natively.
    h = jnp.dot(x_ref[...], w1_ref[...], preferred_element_type=jnp.float32)
    h = jnp.maximum(h + b1_ref[...], 0.0)

    # fc2 partial contribution of this d_ff chunk.
    w2 = w2_ref[...]
    if h.dtype != w2.dtype:           # only downcast when weights are low-precision
        h = h.astype(w2.dtype)
    acc_ref[...] += jnp.dot(h, w2, preferred_element_type=jnp.float32)

    @pl.when(k == pl.num_programs(1) - 1)
    def _():
        o_ref[...] = (acc_ref[...] + b2_ref[...]).astype(o_ref.dtype)


def _ffn_kernel_f32out(x_ref, w1_ref, b1_ref, w2_ref, b2_ref, o_ref):
    """f32 output: accumulate directly into the resident output tile (no scratch)."""
    k = pl.program_id(1)

    @pl.when(k == 0)
    def _():
        o_ref[...] = jnp.zeros_like(o_ref)

    h = jnp.dot(x_ref[...], w1_ref[...], preferred_element_type=jnp.float32)
    h = jnp.maximum(h + b1_ref[...], 0.0)

    w2 = w2_ref[...]
    if h.dtype != w2.dtype:
        h = h.astype(w2.dtype)
    o_ref[...] += jnp.dot(h, w2, preferred_element_type=jnp.float32)

    @pl.when(k == pl.num_programs(1) - 1)
    def _():
        o_ref[...] += b2_ref[...]


# ---------------------------------------------------------------------------
# Chip-aware tile / VMEM sizing
# ---------------------------------------------------------------------------

def _tpu_chip_info():
    """Best-effort (generation, vmem_capacity_bytes); safe defaults elsewhere."""
    kind = ""
    try:
        kind = (getattr(jax.devices()[0], "device_kind", "") or "").lower()
    except Exception:
        pass
    if "v7" in kind or "7x" in kind:
        gen = 7
    elif "v6" in kind:
        gen = 6
    elif "v5" in kind:
        gen = 5
    elif "v4" in kind:
        gen = 4
    elif "v3" in kind or "v2" in kind:
        gen = 3
    else:
        gen = 6
    if gen >= 7:
        vmem_cap = 64 * _MIB
    elif gen >= 4:
        vmem_cap = 128 * _MIB
    else:
        vmem_cap = 16 * _MIB
    try:  # authoritative when available
        cap = getattr(pltpu.get_tpu_info(), "vmem_capacity_bytes", None)
        if cap:
            vmem_cap = int(cap)
    except Exception:
        pass
    return gen, vmem_cap


def _pick_ff_tile(d_ff, max_tf, pref_mult):
    """Largest tf <= max_tf dividing d_ff, preferring multiples of pref_mult
    (256 feeds the 2x256x256 MXU on v6e/v7x), falling back to multiples of 128."""
    if d_ff <= max_tf:
        return d_ff
    for mult in dict.fromkeys((pref_mult, 128)):
        cand = (max_tf // mult) * mult
        while cand >= mult:
            if d_ff % cand == 0:
                return cand
            cand -= mult
    return d_ff  # ragged large d_ff (rare): keep it resident


def _vmem_bytes(tm, tf, d_model, x_bytes, w_bytes, wbuf, use_acc_scratch):
    return (
        2 * tm * d_model * x_bytes            # x row tiles (double-buffered)
        + 2 * tm * d_model * x_bytes          # output row tiles
        + wbuf * d_model * tf * w_bytes       # w1 chunks
        + wbuf * tf * d_model * w_bytes       # w2 chunks
        + wbuf * 8 * tf * w_bytes             # b1 chunks (sublane-padded)
        + 2 * 8 * d_model * w_bytes           # b2
        + (tm * d_model * 4 if use_acc_scratch else 0)  # f32 accumulator
        + tm * tf * 4                         # (tm, tf) f32 intermediate h
    )


def _weight_spec(block_shape, index_map, nbuf):
    """BlockSpec for a streamed weight chunk, optionally >2-deep buffered."""
    if nbuf > 2:
        try:
            return pl.BlockSpec(block_shape, index_map,
                                pipeline_mode=pl.Buffered(int(nbuf)))
        except TypeError:  # Pallas build without pipeline_mode: fall back to 2
            pass
    return pl.BlockSpec(block_shape, index_map)


# ---------------------------------------------------------------------------
# Public wrapper
# ---------------------------------------------------------------------------

def position_wise_feed_forward(x, w1, b1, w2, b2, *, tm=None, tf=None,
                               weight_buffers=2):
    """y = relu(x @ w1 + b1) @ w2 + b2.

    x: (..., d_model); returns the same shape/dtype.  Weights are pre-transposed
    vs torch nn.Linear: w1 (d_model, d_ff), w2 (d_ff, d_model).
    `weight_buffers=3` deepens w1/w2 pipelining (useful on v5e/v6e if weight DMA
    is exposed); keep 2 on v7x.
    """
    d_model = x.shape[-1]
    d_ff = w1.shape[-1]
    assert w1.shape == (d_model, d_ff) and w2.shape == (d_ff, d_model)
    lead = x.shape[:-1]
    n_rows = int(math.prod(lead)) if lead else 1
    x2d = x.reshape(n_rows, d_model)

    x_bytes = jnp.dtype(x.dtype).itemsize
    w_bytes = jnp.dtype(w1.dtype).itemsize
    out_is_f32 = jnp.dtype(x.dtype) == jnp.float32

    gen, vmem_cap = _tpu_chip_info()
    # Sublane alignment for the row tile: 8 (f32), 16 (bf16), 32 (1-byte dtypes).
    align = max(8, 32 // max(1, x_bytes))

    # ---- d_ff chunk (tf): streamed reduction.  Chip-aware ceiling so the
    # double-buffered weight chunks leave VMEM room for a large row tile. ----
    pref_mult = 256 if gen >= 6 else 128
    if gen >= 7:
        max_tf_default = 512        # 64 MiB VMEM: keep weight chunks <= ~16 MiB
    elif gen == 6:
        max_tf_default = 1024
    else:
        max_tf_default = 2048
    if tf is None or tf <= 0 or d_ff % tf != 0 or (tf % 128 != 0 and tf != d_ff):
        tf = _pick_ff_tile(d_ff, max_tf_default, pref_mult)

    # ---- Row tile (tm): weights are re-streamed once per row tile, so the
    # flops/byte on weight traffic is ~tm; pick tm above the chip's
    # compute-bound threshold (v6e ~650, v7x ~310, v5e ~240). ----
    if tm is None or tm <= 0:
        if gen >= 7:
            tm = 512
        elif gen == 6:
            tm = 1024 if x_bytes <= 2 else 512
        else:
            tm = 512 if x_bytes <= 2 else 256
    tm = _round_up(max(align, min(tm, _round_up(n_rows, align))), align)

    # v7x has 2 TensorCores: the "parallel" row axis shards across them, so
    # aim for >= 2 (and preferably an even number of) row tiles.
    if gen >= 7 and n_rows > 2 * align:
        tiles = _cdiv(n_rows, tm)
        if tiles == 1:
            tm = _round_up(_cdiv(n_rows, 2), align)
        elif tiles % 2 == 1:
            cand = _round_up(_cdiv(n_rows, tiles + 1), align)
            if cand >= align and _cdiv(n_rows, cand) % 2 == 0:
                tm = cand

    # ---- Fit the working set inside real VMEM (chip-aware cap + headroom). ----
    wbuf = max(2, int(weight_buffers))
    cap = max(24 * _MIB, vmem_cap - 12 * _MIB)
    headroom = 8 * _MIB
    while True:
        need = _vmem_bytes(tm, tf, d_model, x_bytes, w_bytes, wbuf,
                           use_acc_scratch=not out_is_f32)
        if need + headroom <= cap:
            break
        if tf > 128:
            new_tf = _pick_ff_tile(d_ff, max(128, tf // 2), 128)
            if new_tf < tf:
                tf = new_tf
                continue
        if tm > align:
            tm = max(align, _round_up(tm // 2, align))
            continue
        break  # already at minimal tiles; let the compiler try with the full cap
    vmem_limit = int(max(32 * _MIB, min(cap, need + headroom)))

    row_tiles = _cdiv(n_rows, tm)
    ff_tiles = _cdiv(d_ff, tf)
    grid = (row_tiles, ff_tiles)

    b1_2d = b1.reshape(1, d_ff)
    b2_2d = b2.reshape(1, d_model)

    # Advisory cost for XLA's scheduler.  Weight traffic scales with row_tiles
    # because w1/w2 are re-streamed from HBM once per row tile.
    rows_padded = row_tiles * tm
    flops = 4 * rows_padded * d_model * d_ff
    bytes_accessed = (
        n_rows * d_model * x_bytes                    # activations in
        + n_rows * d_model * x_bytes                  # activations out
        + row_tiles * (2 * d_model * d_ff + d_ff + d_model) * w_bytes)

    in_specs = [
        pl.BlockSpec((tm, d_model), lambda i, k: (i, 0)),          # x rows (resident over k)
        _weight_spec((d_model, tf), lambda i, k: (0, k), wbuf),    # w1 chunk (streamed)
        pl.BlockSpec((1, tf), lambda i, k: (0, k)),                # b1 chunk
        _weight_spec((tf, d_model), lambda i, k: (k, 0), wbuf),    # w2 chunk (streamed)
        pl.BlockSpec((1, d_model), lambda i, k: (0, 0)),           # b2 (constant block)
    ]
    out_spec = pl.BlockSpec((tm, d_model), lambda i, k: (i, 0))

    kernel = _ffn_kernel_f32out if out_is_f32 else _ffn_kernel_acc
    scratch = [] if out_is_f32 else [pltpu.VMEM((tm, d_model), jnp.float32)]

    out2d = pl.pallas_call(
        kernel,
        out_shape=jax.ShapeDtypeStruct((n_rows, d_model), x.dtype),
        grid_spec=pltpu.PrefetchScalarGridSpec(
            num_scalar_prefetch=0,
            grid=grid,
            in_specs=in_specs,
            out_specs=out_spec,
            scratch_shapes=scratch,
        ),
        compiler_params=pltpu.CompilerParams(
            dimension_semantics=("parallel", "arbitrary"),
            vmem_limit_bytes=vmem_limit,
        ),
        cost_estimate=pl.CostEstimate(
            flops=flops, transcendentals=0, bytes_accessed=bytes_accessed),
    )(x2d, w1, b1_2d, w2, b2_2d)

    return out2d.reshape(*lead, d_model)


# ---------------------------------------------------------------------------
# Params / reference / demo
# ---------------------------------------------------------------------------

def init_params(key, d_model, d_ff, dtype=jnp.float32):
    """PyTorch nn.Linear-style init (uniform +-1/sqrt(fan_in)), weights pre-transposed."""
    k1, k2, k3, k4 = jax.random.split(key, 4)
    bound1 = 1.0 / math.sqrt(d_model)
    bound2 = 1.0 / math.sqrt(d_ff)
    w1 = jax.random.uniform(k1, (d_model, d_ff), dtype, -bound1, bound1)
    b1 = jax.random.uniform(k2, (d_ff,), dtype, -bound1, bound1)
    w2 = jax.random.uniform(k3, (d_ff, d_model), dtype, -bound2, bound2)
    b2 = jax.random.uniform(k4, (d_model,), dtype, -bound2, bound2)
    return w1, b1, w2, b2


def _ref_ffn(x, w1, b1, w2, b2):
    hp = jax.lax.Precision.HIGHEST
    h = jnp.maximum(jnp.dot(x, w1, precision=hp) + b1, 0.0)
    return jnp.dot(h, w2, precision=hp) + b2


if __name__ == "__main__":
    # 1) Small shapes consistent with the PyTorch module (f32, direct-output path).
    batch, seq, d_model, d_ff = 2, 8, 32, 64
    key = jax.random.PRNGKey(0)
    kx, kp = jax.random.split(key)
    x = jax.random.normal(kx, (batch, seq, d_model), jnp.float32)
    w1, b1, w2, b2 = init_params(kp, d_model, d_ff)

    y = jax.block_until_ready(position_wise_feed_forward(x, w1, b1, w2, b2))
    ref = _ref_ffn(x, w1, b1, w2, b2)
    assert y.shape == x.shape
    assert jnp.allclose(y, ref, atol=1e-5, rtol=1e-5), "mismatch vs reference (small)"

    # 2) Ragged row count + streamed d_ff reduction + user-supplied tiles.
    d_model2, d_ff2 = 128, 512
    x2 = jax.random.normal(kx, (3, 100, d_model2), jnp.float32)
    p2 = init_params(kp, d_model2, d_ff2)
    y2 = jax.block_until_ready(position_wise_feed_forward(x2, *p2, tm=64, tf=128))
    ref2 = _ref_ffn(x2, *p2)
    assert y2.shape == x2.shape
    assert jnp.allclose(y2, ref2, atol=1e-4, rtol=1e-4), "mismatch vs reference (tiled)"

    # 3) bf16 exercises the f32-accumulator-scratch kernel variant.
    x3 = jax.random.normal(kx, (2, 64, 128), jnp.bfloat16)
    p3 = init_params(kp, 128, 256, dtype=jnp.bfloat16)
    y3 = jax.block_until_ready(position_wise_feed_forward(x3, *p3))
    ref3 = _ref_ffn(x3.astype(jnp.float32),
                    *[p.astype(jnp.float32) for p in p3]).astype(jnp.bfloat16)
    assert y3.shape == x3.shape
    assert jnp.allclose(y3.astype(jnp.float32), ref3.astype(jnp.float32),
                        atol=5e-2, rtol=5e-2), "mismatch vs reference (bf16)"

    print("KERNEL_OK")
</pallas_src>

<mosaic_0001>
module attributes {stable_mosaic.version = 11 : i64} {
  func.func @_ffn_kernel_f32out(%arg0: i32, %arg1: i32, %arg2: memref<16x32xf32, #tpu.memory_space<vmem>>, %arg3: memref<32x64xf32, #tpu.memory_space<vmem>>, %arg4: memref<1x64xf32, #tpu.memory_space<vmem>>, %arg5: memref<64x32xf32, #tpu.memory_space<vmem>>, %arg6: memref<1x32xf32, #tpu.memory_space<vmem>>, %arg7: memref<16x32xf32, #tpu.memory_space<vmem>>) attributes {dimension_semantics = [#tpu.dimension_semantics<parallel>, #tpu.dimension_semantics<arbitrary>], iteration_bounds = array<i64: 1, 1>, scalar_prefetch = 0 : i64, scratch_operands = 0 : i64, tpu.core_type = #tpu.core_type<tc>, window_params = [{transform_indices = @transform_0, window_bounds = array<i64: 16, 32>}, {transform_indices = @transform_1, window_bounds = array<i64: 32, 64>}, {transform_indices = @transform_2, window_bounds = array<i64: 1, 64>}, {transform_indices = @transform_3, window_bounds = array<i64: 64, 32>}, {pipeline_mode = #tpu.pipeline_mode<synchronous>, transform_indices = @transform_4, window_bounds = array<i64: 1, 32>}, {transform_indices = @transform_5, window_bounds = array<i64: 16, 32>}]} {
    %c0_i32 = arith.constant 0 : i32
    %0 = arith.cmpi eq, %arg1, %c0_i32 : i32
    %1 = arith.extui %0 : i1 to i32
    %c0_i32_0 = arith.constant 0 : i32
    %2 = arith.cmpi ne, %1, %c0_i32_0 : i32
    scf.if %2 {
      %cst_16 = arith.constant 0.000000e+00 : f32
      %19 = vector.broadcast %cst_16 : f32 to vector<16x32xf32>
      %c0_17 = arith.constant 0 : index
      %c0_18 = arith.constant 0 : index
      %20 = vector.load %arg7[%c0_17, %c0_18] : memref<16x32xf32, #tpu.memory_space<vmem>>, vector<16x32xf32>
      tpu.vector_store %arg7[%c0_17, %c0_18], %19 {strides = array<i32>} : memref<16x32xf32, #tpu.memory_space<vmem>>, vector<16x32xf32>,
    } else {
    }
    %c0 = arith.constant 0 : index
    %c0_1 = arith.constant 0 : index
    %3 = vector.load %arg2[%c0, %c0_1] : memref<16x32xf32, #tpu.memory_space<vmem>>, vector<16x32xf32>
    %c0_2 = arith.constant 0 : index
    %c0_3 = arith.constant 0 : index
    %4 = vector.load %arg3[%c0_2, %c0_3] : memref<32x64xf32, #tpu.memory_space<vmem>>, vector<32x64xf32>
    %cst = arith.constant dense<0.000000e+00> : vector<16x64xf32>
    %5 = tpu.matmul %3, %4, %cst {dimension_numbers = #tpu.dot_dimension_numbers<[1], [0], [0], [1], [0, 0, 1, 1], [], []>} : vector<16x32xf32>, vector<32x64xf32>, vector<16x64xf32> -> vector<16x64xf32>
    %c0_4 = arith.constant 0 : index
    %c0_5 = arith.constant 0 : index
    %6 = vector.load %arg4[%c0_4, %c0_5] : memref<1x64xf32, #tpu.memory_space<vmem>>, vector<1x64xf32>
    %7 = vector.broadcast %6 : vector<1x64xf32> to vector<16x64xf32>
    %8 = arith.addf %5, %7 : vector<16x64xf32>
    %cst_6 = arith.constant 0.000000e+00 : f32
    %9 = vector.broadcast %cst_6 : f32 to vector<16x64xf32>
    %10 = arith.maximumf %8, %9 : vector<16x64xf32>
    %c0_7 = arith.constant 0 : index
    %c0_8 = arith.constant 0 : index
    %11 = vector.load %arg5[%c0_7, %c0_8] : memref<64x32xf32, #tpu.memory_space<vmem>>, vector<64x32xf32>
    %c0_9 = arith.constant 0 : index
    %c0_10 = arith.constant 0 : index
    %12 = vector.load %arg7[%c0_9, %c0_10] : memref<16x32xf32, #tpu.memory_space<vmem>>, vector<16x32xf32>
    %cst_11 = arith.constant dense<0.000000e+00> : vector<16x32xf32>
    %13 = tpu.matmul %10, %11, %cst_11 {dimension_numbers = #tpu.dot_dimension_numbers<[1], [0], [0], [1], [0, 0, 1, 1], [], []>} : vector<16x64xf32>, vector<64x32xf32>, vector<16x32xf32> -> vector<16x32xf32>
    %14 = arith.addf %12, %13 : vector<16x32xf32>
    %c0_12 = arith.constant 0 : index
    %c0_13 = arith.constant 0 : index
    %15 = vector.load %arg7[%c0_12, %c0_13] : memref<16x32xf32, #tpu.memory_space<vmem>>, vector<16x32xf32>
    tpu.vector_store %arg7[%c0_12, %c0_13], %14 {strides = array<i32>} : memref<16x32xf32, #tpu.memory_space<vmem>>, vector<16x32xf32>,
    %c0_i32_14 = arith.constant 0 : i32
    %16 = arith.cmpi eq, %arg1, %c0_i32_14 : i32
    %17 = arith.extui %16 : i1 to i32
    %c0_i32_15 = arith.constant 0 : i32
    %18 = arith.cmpi ne, %17, %c0_i32_15 : i32
    scf.if %18 {
      %c0_16 = arith.constant 0 : index
      %c0_17 = arith.constant 0 : index
      %19 = vector.load %arg7[%c0_16, %c0_17] : memref<16x32xf32, #tpu.memory_space<vmem>>, vector<16x32xf32>
      %c0_18 = arith.constant 0 : index
      %c0_19 = arith.constant 0 : index
      %20 = vector.load %arg6[%c0_18, %c0_19] : memref<1x32xf32, #tpu.memory_space<vmem>>, vector<1x32xf32>
      %21 = vector.broadcast %20 : vector<1x32xf32> to vector<16x32xf32>
      %22 = arith.addf %19, %21 : vector<16x32xf32>
      %c0_20 = arith.constant 0 : index
      %c0_21 = arith.constant 0 : index
      %23 = vector.load %arg7[%c0_20, %c0_21] : memref<16x32xf32, #tpu.memory_space<vmem>>, vector<16x32xf32>
      tpu.vector_store %arg7[%c0_20, %c0_21], %22 {strides = array<i32>} : memref<16x32xf32, #tpu.memory_space<vmem>>, vector<16x32xf32>,
    } else {
    }
    return
  }
  func.func @transform_0(%arg0: i32, %arg1: i32) -> (i32, i32) {
    %c0_i32 = arith.constant 0 : i32
    %c0_i32_0 = arith.constant 0 : i32
    return %arg0, %c0_i32 : i32, i32
  }
  func.func @transform_1(%arg0: i32, %arg1: i32) -> (i32, i32) {
    %c0_i32 = arith.constant 0 : i32
    %c0_i32_0 = arith.constant 0 : i32
    return %c0_i32, %arg1 : i32, i32
  }
  func.func @transform_2(%arg0: i32, %arg1: i32) -> (i32, i32) {
    %c0_i32 = arith.constant 0 : i32
    %c0_i32_0 = arith.constant 0 : i32
    return %c0_i32, %arg1 : i32, i32
  }
  func.func @transform_3(%arg0: i32, %arg1: i32) -> (i32, i32) {
    %c0_i32 = arith.constant 0 : i32
    %c0_i32_0 = arith.constant 0 : i32
    return %arg1, %c0_i32 : i32, i32
  }
  func.func @transform_4(%arg0: i32, %arg1: i32) -> (i32, i32) {
    %c0_i32 = arith.constant 0 : i32
    %c0_i32_0 = arith.constant 0 : i32
    %c0_i32_1 = arith.constant 0 : i32
    return %c0_i32, %c0_i32_0 : i32, i32
  }
  func.func @transform_5(%arg0: i32, %arg1: i32) -> (i32, i32) {
    %c0_i32 = arith.constant 0 : i32
    %c0_i32_0 = arith.constant 0 : i32
    return %arg0, %c0_i32 : i32, i32
  }
}

</mosaic_0001>

<llo_original>
// kernel: tpu_custom_call.1
$region0: #{tpu_custom_call.1}
  #allocation0 [shape = 'u32[]', space=smem, size = 0x4, offset = 0x4, fixed_abs, tag = 'smem constant byte address 0x4 - core index']
  #allocation1 [shape = 'u32[72,128]{1,0:T(1,128)}', space=vmem, size = 0x9000, scoped, tag = 'internal scratch']
  %s0 = inlined_call_operand.vmem [shape: f32[16,32], index: 0, kind: input, shape index: {}]
  %s1 = inlined_call_operand.vmem [shape: f32[32,64], index: 1, kind: input, shape index: {}]
  %s2 = inlined_call_operand.vmem [shape: f32[1,64], index: 2, kind: input, shape index: {}]
  %s3 = inlined_call_operand.vmem [shape: f32[64,32], index: 3, kind: input, shape index: {}]
  %s4 = inlined_call_operand.vmem [shape: f32[1,32], index: 4, kind: input, shape index: {}]
  %s5 = inlined_call_operand.hbm [shape: f32[16,32], index: 5, kind: output, shape index: {}]
  %s6 = sld [smem:[#allocation0]]
  $region38: #{tpu_custom_call.1} parent=0
    _
  %s8 = ssub.s32 1, %s6
  %s9 = scalar_select 0, %s8, %s6
  $region1: #{tpu_custom_call.1} parent=0
    #allocation2 [shape = 'u8[8192]{0}', space=vmem, size = 0x2000, scoped, tag = 'output window, operand 0, single buffered']
    #allocation3 [shape = 's32[1]{0}', space=sflag, size = 0x4, scoped, tag = 'scoped memory for tpu_custom_call.1']
    %10 = vsyncpa [#allocation3], 0
    // Predicated region
    $region2: #{tpu_custom_call.1} parent=1 // pred_check
      _
    $region3: #{tpu_custom_call.1} parent=1 // pred_check_branch
      %12 = sbr.rel (0) target = $region5
    $region4: #{tpu_custom_call.1} parent=1 // pred_region
      _
    $region5: #{tpu_custom_call.1} parent=1 // pred_fallthru
      _
    // Predicated region
    $region6: #{tpu_custom_call.1} parent=1 // pred_check
      _
    $region7: #{tpu_custom_call.1} parent=1 // pred_check_branch
      %14 = sbr.rel (0) target = $region9
    $region8: #{tpu_custom_call.1} parent=1 // pred_region
      _
    $region9: #{tpu_custom_call.1} parent=1 // pred_fallthru
      _
    // Predicated region
    $region10: #{tpu_custom_call.1} parent=1 // pred_check
      _
    $region11: #{tpu_custom_call.1} parent=1 // pred_check_branch
      %16 = sbr.rel (0) target = $region13
    $region12: #{tpu_custom_call.1} parent=1 // pred_region
      _
    $region13: #{tpu_custom_call.1} parent=1 // pred_fallthru
      _
    // Predicated region
    $region14: #{tpu_custom_call.1} parent=1 // pred_check
      _
    $region15: #{tpu_custom_call.1} parent=1 // pred_check_branch
      %18 = sbr.rel (0) target = $region17
    $region16: #{tpu_custom_call.1} parent=1 // pred_region
      _
    $region17: #{tpu_custom_call.1} parent=1 // pred_fallthru
      _
    // Predicated region
    $region18: #{tpu_custom_call.1} parent=1 // pred_check
      _
    $region19: #{tpu_custom_call.1} parent=1 // pred_check_branch
      %20 = sbr.rel (0) target = $region21
    $region20: #{tpu_custom_call.1} parent=1 // pred_region
      _
    $region21: #{tpu_custom_call.1} parent=1 // pred_fallthru
      _
    %p21 = scmp.eq.s32.totalorder 0, 0
    // Predicated region
    $region22: #{tpu_custom_call.1} parent=1 // pred_check
      %p22 = pneg %p21
    $region23: #{tpu_custom_call.1} parent=1 // pred_check_branch
      %24 = sbr.rel (%p22) target = $region25
    $region24: #{tpu_custom_call.1} parent=1 // pred_region
      %vm25 = vcmask 261120
      %26 = vst.msk [vmem:[#allocation2] sm:$0xff] %vm25, 0.0
      %27 = vst.msk [vmem:[#allocation2 + $0x8] sm:$0xff] %vm25, 0.0
    $region25: #{tpu_custom_call.1} parent=1 // pred_fallthru
      _
    %v28 = vld [vmem:[%s0] sm:$0xff]
    %v29 = vld [vmem:[%s0 + $0x8] sm:$0xff]
    %v30 = vld [vmem:[%s1] sm:$0xff]
    %v31 = vld [vmem:[%s1 + $0x8] sm:$0xff]
    %v32 = vld [vmem:[%s1 + $0x10] sm:$0xff]
    %v33 = vld [vmem:[%s1 + $0x18] sm:$0xff]
    %v34 = vld [vmem:[%s2] sm:$0x1]
    %v36 = vperm.slane %v34, 0
    %vm38 = vcmask 261120
    %v40 = vsel %vm38, %v28, 0
    %v43 = vsel %vm38, %v29, 0
    %45 = vmatpush.msra.mxu0 0.0
    %46 = vmatpush.msra.mxu0 0.0
    %47 = vmatpush.msra.mxu0 0.0
    %48 = vmatpush.msra.mxu0 0.0
    %49 = vmatpush.msra.mxu0 0.0
    %50 = vmatpush.msra.mxu0 0.0
    %51 = vmatpush.msra.mxu0 0.0
    %52 = vmatpush.msra.mxu0 0.0
    %53 = vmatpush.msra.mxu0 0.0
    %54 = vmatpush.msra.mxu0 0.0
    %55 = vmatpush.msra.mxu0 0.0
    %56 = vmatpush.msra.mxu0 0.0
    %57 = vmatpush.msra.mxu0 %v33
    %58 = vmatpush.msra.mxu0 %v32
    %59 = vmatpush.msra.mxu0 %v31
    %60 = vmatpush.msra.mxu0 %v30
    %61 = vmatmul.f32.gmra.mxu0 %v40
    %v62 = vpop.f32.mrf.mxu0
    %v63 = vadd.f32 %v36, %v62
    %64 = vmatmul.f32.gmra.mxu0 %v43
    %v65 = vpop.f32.mrf.mxu0
    %v66 = vadd.f32 %v36, %v65
    %67 = vdwg.mxu0
    %v68 = vmax.f32 %v63, 0.0
    %v69 = vmax.f32 %v66, 0.0
    %v70 = vld [vmem:[%s3] sm:$0xff]
    %v71 = vld [vmem:[%s3 + $0x8] sm:$0xff]
    %v72 = vld [vmem:[%s3 + $0x10] sm:$0xff]
    %v73 = vld [vmem:[%s3 + $0x18] sm:$0xff]
    %v74 = vld [vmem:[%s3 + $0x20] sm:$0xff]
    %v75 = vld [vmem:[%s3 + $0x28] sm:$0xff]
    %v76 = vld [vmem:[%s3 + $0x30] sm:$0xff]
    %v77 = vld [vmem:[%s3 + $0x38] sm:$0xff]
    %v78 = vld [vmem:[#allocation2] sm:$0xff]
    %v79 = vld [vmem:[#allocation2 + $0x8] sm:$0xff]
    %vm80 = vcmask 523264
    %v82 = vsel %vm80, %v68, 0
    %v85 = vsel %vm80, %v69, 0
    %87 = vmatpush.msra.mxu0 0.0
    %88 = vmatpush.msra.mxu0 0.0
    %89 = vmatpush.msra.mxu0 0.0
    %90 = vmatpush.msra.mxu0 0.0
    %91 = vmatpush.msra.mxu0 0.0
    %92 = vmatpush.msra.mxu0 0.0
    %93 = vmatpush.msra.mxu0 0.0
    %94 = vmatpush.msra.mxu0 0.0
    %95 = vmatpush.msra.mxu0 %v77
    %96 = vmatpush.msra.mxu0 %v76
    %97 = vmatpush.msra.mxu0 %v75
    %98 = vmatpush.msra.mxu0 %v74
    %99 = vmatpush.msra.mxu0 %v73
    %100 = vmatpush.msra.mxu0 %v72
    %101 = vmatpush.msra.mxu0 %v71
    %102 = vmatpush.msra.mxu0 %v70
    %103 = vmatmul.f32.gmra.mxu0 %v82
    %v104 = vpop.f32.mrf.mxu0
    %v105 = vadd.f32 0.0, %v104
    %106 = vmatmul.f32.gmra.mxu0 %v85
    %v107 = vpop.f32.mrf.mxu0
    %v108 = vadd.f32 0.0, %v107
    %109 = vdwg.mxu0
    %v110 = vadd.f32 %v78, %v105
    %v111 = vadd.f32 %v79, %v108
    %112 = vst.msk [vmem:[#allocation2] sm:$0xff] %vm38, %v110
    %113 = vst.msk [vmem:[#allocation2 + $0x8] sm:$0xff] %vm38, %v111
    // Predicated region
    $region26: #{tpu_custom_call.1} parent=1 // pred_check
      %p114 = pneg %p21
    $region27: #{tpu_custom_call.1} parent=1 // pred_check_branch
      %116 = sbr.rel (%p114) target = $region29
    $region28: #{tpu_custom_call.1} parent=1 // pred_region
      %v117 = vld [vmem:[#allocation2] sm:$0xff]
      %v118 = vld [vmem:[#allocation2 + $0x8] sm:$0xff]
      %v119 = vld [vmem:[%s4] sm:$0x1]
      %v121 = vperm.slane %v119, 0
      %v123 = vadd.f32 %v117, %v121
      %v124 = vadd.f32 %v118, %v121
      %125 = vst.msk [vmem:[#allocation2] sm:$0xff] %vm38, %v123
      %126 = vst.msk [vmem:[#allocation2 + $0x8] sm:$0xff] %vm38, %v124
    $region29: #{tpu_custom_call.1} parent=1 // pred_fallthru
      _
    // Predicated region
    $region30: #{tpu_custom_call.1} parent=1 // pred_check
      _
    $region31: #{tpu_custom_call.1} parent=1 // pred_check_branch
      %128 = sbr.rel (0) target = $region33
    $region32: #{tpu_custom_call.1} parent=1 // pred_region
      %130 = vsyncadd [#allocation3], 0
      %s131 = sshll.u32 [#allocation2], 4
      %s132 = int_to_ptr.vmem [resolvable:$true] %s131
      %s133 = sshll.u32 %s5, 4
      %s134 = int_to_ptr.hbm [resolvable:$true] %s133
      %139 = dma.vmem_to_hbm [thread:$0]  %s132, 256, %s134, [#allocation3], 128, 128, 8
    $region33: #{tpu_custom_call.1} parent=1 // pred_fallthru
      _
    // Predicated region
    $region34: #{tpu_custom_call.1} parent=1 // pred_check
      _
    $region35: #{tpu_custom_call.1} parent=1 // pred_check_branch
      %141 = sbr.rel (0) target = $region37
    $region36: #{tpu_custom_call.1} parent=1 // pred_region
      %143 = dma.done [#allocation3], 256
    $region37: #{tpu_custom_call.1} parent=1 // pred_fallthru
      _
    %144 = vsyncpa [#allocation3], 1

</llo_original>
